<compile_context>
chip_gen: v6e
topology: v6e:2x2x1
jax: 0.10.0
libtpu: 0.0.40
codegen_flags: <defaults>
</compile_context>

<pallas_src>
import functools

import jax
import jax.numpy as jnp
from jax.experimental import pallas as pl
from jax.experimental.pallas import tpu as pltpu

EPS = 1e-8


def dsconv_kernel(prelu_ref,            # SMEM (1,) f32
                  x_ref,                # VMEM [Cin, K] f32
                  dw_ref,               # VMEM [Cin, KS] f32 (depthwise taps)
                  g_ref, b_ref,         # VMEM [Cin, 1]  f32 (gLN gamma/beta)
                  w_ref,                # VMEM [Cout, Cin] bf16 (pointwise)
                  o_ref,                # VMEM [Cout, K]
                  *, kernel_size, dilation):
    x = x_ref[...].astype(jnp.float32)                       # [Cin, K]
    cin, K = x.shape
    center = (kernel_size - 1) // 2

    # --- depthwise conv1d, stride=1, 'same' padding, groups=Cin ---
    # pltpu.roll needs a non-negative shift; boundary zeros come from a [1, K]
    # mask row broadcast in the multiply (no full-tile iota/select passes).
    pos = jax.lax.broadcasted_iota(jnp.int32, (1, K), 1)
    y = x * dw_ref[:, center:center + 1]
    for t in range(kernel_size):
        if t == center:
            continue
        off = (t - center) * dilation                        # static tap offset
        z = pltpu.roll(x, (-off) % K, axis=1)                # z[:, k] == x[:, k + off] (circular)
        mask = ((pos + off >= 0) & (pos + off < K)).astype(jnp.float32)   # [1, K]
        y = y + (z * mask) * dw_ref[:, t:t + 1]

    # --- PReLU (single shared parameter) ---
    a = prelu_ref[0]
    y = jnp.where(y >= 0.0, y, a * y)

    # --- gLN: fused single-pass stats + rsqrt on the EUP ---
    inv_nk = 1.0 / (cin * K)
    mean = jnp.sum(y) * inv_nk
    var = jnp.maximum(jnp.sum(y * y) * inv_nk - mean * mean, 0.0)
    r = jax.lax.rsqrt(var + EPS)
    y = (y - mean) * (g_ref[...] * r) + b_ref[...]

    # --- pointwise 1x1 conv: [Cout, Cin] @ [Cin, K], bf16 MXU, f32 accumulate ---
    out = jnp.dot(w_ref[...], y.astype(jnp.bfloat16),
                  preferred_element_type=jnp.float32)
    o_ref[...] = out.astype(o_ref.dtype)


def _vmem_budget(cin, cout, K, ks):
    f32 = 4
    x_blk = cin * K * f32
    o_blk = cout * K * f32
    param = cin * ks * f32 + 2 * cin * f32 + cout * cin * 2      # dw + gamma/beta + bf16 w
    live = 8 * cin * K * f32 + cout * K * f32                    # in-flight f32 temporaries
    est = 2 * (x_blk + o_blk) + 2 * param + live                 # double-buffered blocks
    return int(min(max(2 * est, 16 << 20), 48 << 20))            # floor 16 MiB, cap < v7x 64 MiB


def dsconv_pallas(x, params, *, kernel_size=3, dilation=1):
    """x: [M, Cin, K] float32 (PyTorch NCL). Returns [M, Cout, K] float32."""
    M, cin, K = x.shape
    cout = params["w_pw"].shape[0]

    # TODO(synk): stride != 1 / non-'same' padding variants of the depthwise conv
    #             are not implemented (module is used with stride=1 'same' padding).
    # TODO(synk): for long K, tile K with a two-pass gLN (accumulate sum/sumsq per
    #             item, then normalize + matmul per K tile) to bound VMEM on v7x.

    kern = functools.partial(dsconv_kernel,
                             kernel_size=kernel_size, dilation=dilation)

    def whole(arr):
        return pl.BlockSpec(arr.shape, lambda b: (0,) * arr.ndim)

    return pl.pallas_call(
        kern,
        out_shape=jax.ShapeDtypeStruct((M, cout, K), x.dtype),
        grid=(M,),
        in_specs=[
            pl.BlockSpec(memory_space=pltpu.MemorySpace.SMEM),             # prelu scalar
            pl.BlockSpec((pl.Squeezed(), cin, K), lambda b: (b, 0, 0)),    # x (kernel sees [Cin,K])
            whole(params["dw"]),                                           # [Cin, KS]
            whole(params["gamma"]),                                        # [Cin, 1]
            whole(params["beta"]),                                         # [Cin, 1]
            whole(params["w_pw"]),                                         # [Cout, Cin] bf16
        ],
        out_specs=pl.BlockSpec((pl.Squeezed(), cout, K), lambda b: (b, 0, 0)),
        compiler_params=pltpu.CompilerParams(
            dimension_semantics=("parallel",),
            vmem_limit_bytes=_vmem_budget(cin, cout, K, kernel_size),
        ),
    )(params["prelu"], x, params["dw"], params["gamma"], params["beta"],
      params["w_pw"])


def dsconv_reference(x, params, *, kernel_size=3, dilation=1):
    """Pure-JAX reference in PyTorch layout [M, Cin, K] (f32 everywhere)."""
    M, cin, K = x.shape
    dw = params["dw"]                                          # [Cin, KS]
    pad = (kernel_size - 1) * dilation // 2
    xp = jnp.pad(x, ((0, 0), (0, 0), (pad, pad)))
    y = jnp.zeros_like(x)
    for t in range(kernel_size):
        y = y + dw[None, :, t:t + 1] * xp[:, :, t * dilation:t * dilation + K]
    a = params["prelu"][0]
    y = jnp.where(y >= 0.0, y, a * y)
    mean = jnp.mean(y, axis=(1, 2), keepdims=True)
    var = jnp.mean((y - mean) ** 2, axis=(1, 2), keepdims=True)
    y = params["gamma"][None] * (y - mean) / jnp.sqrt(var + EPS) + params["beta"][None]
    return jnp.einsum("on,mnk->mok", params["w_pw"].astype(jnp.float32), y)


if __name__ == "__main__":
    # Small shapes: batch=2, in_channels=16, out_channels=32, length=128 (lane-dense).
    M, CIN, COUT, K, KS = 2, 16, 32, 128, 3

    key = jax.random.PRNGKey(0)
    k_x, k_dw, k_w = jax.random.split(key, 3)

    x = jax.random.normal(k_x, (M, CIN, K), dtype=jnp.float32)

    params = {
        # depthwise conv weight: PyTorch [Cin, 1, KS] -> stored as [Cin, KS]
        "dw": 0.1 * jax.random.normal(k_dw, (CIN, KS), dtype=jnp.float32),
        # PReLU default init (single shared parameter)
        "prelu": jnp.array([0.25], dtype=jnp.float32),
        # gLN reset_parameters(): gamma=1, beta=0 (stored as [Cin, 1])
        "gamma": jnp.ones((CIN, 1), jnp.float32),
        "beta": jnp.zeros((CIN, 1), jnp.float32),
        # pointwise conv weight: PyTorch [Cout, Cin, 1] -> [Cout, Cin], bf16 in HBM
        "w_pw": (0.1 * jax.random.normal(k_w, (COUT, CIN), dtype=jnp.float32)
                 ).astype(jnp.bfloat16),
    }

    out = dsconv_pallas(x, params, kernel_size=KS, dilation=1)
    out = jax.block_until_ready(out)

    ref = dsconv_reference(x, params, kernel_size=KS, dilation=1)
    assert out.shape == (M, COUT, K)
    # bf16 MXU inputs (f32 accumulation) -> loosened tolerance vs f32 reference.
    assert jnp.allclose(out, ref, atol=2e-2, rtol=2e-2), "mismatch vs JAX reference"

    print("KERNEL_OK")
</pallas_src>

<mosaic_0001>
module attributes {stable_mosaic.version = 11 : i64} {
  func.func @dsconv_kernel(%arg0: i32, %arg1: memref<1xf32, #tpu.memory_space<smem>>, %arg2: memref<1x16x128xf32, #tpu.memory_space<vmem>>, %arg3: memref<16x3xf32, #tpu.memory_space<vmem>>, %arg4: memref<16x1xf32, #tpu.memory_space<vmem>>, %arg5: memref<16x1xf32, #tpu.memory_space<vmem>>, %arg6: memref<32x16xbf16, #tpu.memory_space<vmem>>, %arg7: memref<1x32x128xf32, #tpu.memory_space<vmem>>) attributes {dimension_semantics = [#tpu.dimension_semantics<parallel>], iteration_bounds = array<i64: 2>, scalar_prefetch = 0 : i64, scratch_operands = 0 : i64, tpu.core_type = #tpu.core_type<tc>, window_params = [{transform_indices = @transform_0, window_bounds = array<i64: 1>}, {transform_indices = @transform_1, window_bounds = array<i64: 1, 16, 128>}, {pipeline_mode = #tpu.pipeline_mode<synchronous>, transform_indices = @transform_2, window_bounds = array<i64: 16, 3>}, {pipeline_mode = #tpu.pipeline_mode<synchronous>, transform_indices = @transform_3, window_bounds = array<i64: 16, 1>}, {pipeline_mode = #tpu.pipeline_mode<synchronous>, transform_indices = @transform_4, window_bounds = array<i64: 16, 1>}, {pipeline_mode = #tpu.pipeline_mode<synchronous>, transform_indices = @transform_5, window_bounds = array<i64: 32, 16>}, {transform_indices = @transform_6, window_bounds = array<i64: 1, 32, 128>}]} {
    %c0 = arith.constant 0 : index
    %c0_0 = arith.constant 0 : index
    %c0_1 = arith.constant 0 : index
    %0 = vector.load %arg2[%c0, %c0_0, %c0_1] : memref<1x16x128xf32, #tpu.memory_space<vmem>>, vector<1x16x128xf32>
    %1 = vector.shape_cast %0 : vector<1x16x128xf32> to vector<16x128xf32>
    %2 = tpu.iota {dimensions = array<i32: 1>} : vector<1x128xi32>
    %c0_2 = arith.constant 0 : index
    %c1 = arith.constant 1 : index
    %3 = vector.load %arg3[%c0_2, %c1] : memref<16x3xf32, #tpu.memory_space<vmem>>, vector<16x1xf32>
    %4 = vector.broadcast %3 : vector<16x1xf32> to vector<16x128xf32>
    %5 = arith.mulf %1, %4 : vector<16x128xf32>
    %c1_i32 = arith.constant 1 : i32
    %6 = tpu.dynamic_rotate %1 by %c1_i32 dim 1 : vector<16x128xf32>, i32 -> vector<16x128xf32>
    %c-1_i32 = arith.constant -1 : i32
    %7 = vector.broadcast %c-1_i32 : i32 to vector<1x128xi32>
    %8 = arith.addi %2, %7 : vector<1x128xi32>
    %c0_i32 = arith.constant 0 : i32
    %9 = vector.broadcast %c0_i32 : i32 to vector<1x128xi32>
    %10 = arith.cmpi sge, %8, %9 : vector<1x128xi32>
    %c-1_i32_3 = arith.constant -1 : i32
    %11 = vector.broadcast %c-1_i32_3 : i32 to vector<1x128xi32>
    %12 = arith.addi %2, %11 : vector<1x128xi32>
    %c128_i32 = arith.constant 128 : i32
    %13 = vector.broadcast %c128_i32 : i32 to vector<1x128xi32>
    %14 = arith.cmpi slt, %12, %13 : vector<1x128xi32>
    %15 = arith.andi %10, %14 : vector<1x128xi1>
    %16 = arith.extui %15 : vector<1x128xi1> to vector<1x128xi32>
    %17 = arith.sitofp %16 : vector<1x128xi32> to vector<1x128xf32>
    %18 = vector.broadcast %17 : vector<1x128xf32> to vector<16x128xf32>
    %19 = arith.mulf %6, %18 : vector<16x128xf32>
    %c0_4 = arith.constant 0 : index
    %c0_5 = arith.constant 0 : index
    %20 = vector.load %arg3[%c0_4, %c0_5] : memref<16x3xf32, #tpu.memory_space<vmem>>, vector<16x1xf32>
    %21 = vector.broadcast %20 : vector<16x1xf32> to vector<16x128xf32>
    %22 = arith.mulf %19, %21 : vector<16x128xf32>
    %23 = arith.addf %5, %22 : vector<16x128xf32>
    %c127_i32 = arith.constant 127 : i32
    %24 = tpu.dynamic_rotate %1 by %c127_i32 dim 1 : vector<16x128xf32>, i32 -> vector<16x128xf32>
    %c1_i32_6 = arith.constant 1 : i32
    %25 = vector.broadcast %c1_i32_6 : i32 to vector<1x128xi32>
    %26 = arith.addi %2, %25 : vector<1x128xi32>
    %c0_i32_7 = arith.constant 0 : i32
    %27 = vector.broadcast %c0_i32_7 : i32 to vector<1x128xi32>
    %28 = arith.cmpi sge, %26, %27 : vector<1x128xi32>
    %c1_i32_8 = arith.constant 1 : i32
    %29 = vector.broadcast %c1_i32_8 : i32 to vector<1x128xi32>
    %30 = arith.addi %2, %29 : vector<1x128xi32>
    %c128_i32_9 = arith.constant 128 : i32
    %31 = vector.broadcast %c128_i32_9 : i32 to vector<1x128xi32>
    %32 = arith.cmpi slt, %30, %31 : vector<1x128xi32>
    %33 = arith.andi %28, %32 : vector<1x128xi1>
    %34 = arith.extui %33 : vector<1x128xi1> to vector<1x128xi32>
    %35 = arith.sitofp %34 : vector<1x128xi32> to vector<1x128xf32>
    %36 = vector.broadcast %35 : vector<1x128xf32> to vector<16x128xf32>
    %37 = arith.mulf %24, %36 : vector<16x128xf32>
    %c0_10 = arith.constant 0 : index
    %c2 = arith.constant 2 : index
    %38 = vector.load %arg3[%c0_10, %c2] : memref<16x3xf32, #tpu.memory_space<vmem>>, vector<16x1xf32>
    %39 = vector.broadcast %38 : vector<16x1xf32> to vector<16x128xf32>
    %40 = arith.mulf %37, %39 : vector<16x128xf32>
    %41 = arith.addf %23, %40 : vector<16x128xf32>
    %c0_11 = arith.constant 0 : index
    %42 = memref.load %arg1[%c0_11] : memref<1xf32, #tpu.memory_space<smem>>
    %cst = arith.constant 0.000000e+00 : f32
    %43 = vector.broadcast %cst : f32 to vector<16x128xf32>
    %44 = arith.cmpf oge, %41, %43 : vector<16x128xf32>
    %45 = vector.broadcast %42 : f32 to vector<16x128xf32>
    %46 = arith.mulf %45, %41 : vector<16x128xf32>
    %47 = arith.select %44, %41, %46 : vector<16x128xi1>, vector<16x128xf32>
    %48 = vector.shape_cast %47 : vector<16x128xf32> to vector<1x16x128xf32>
    %cst_12 = arith.constant dense<0.000000e+00> : vector<1xf32>
    %49 = vector.multi_reduction <add>, %48, %cst_12 [1, 2] : vector<1x16x128xf32> to vector<1xf32>
    %50 = vector.shape_cast %49 : vector<1xf32> to vector<1x1x1xf32>
    %51 = vector.extract %50[0, 0, 0] : f32 from vector<1x1x1xf32>
    %cst_13 = arith.constant 4.8828125E-4 : f32
    %52 = arith.mulf %51, %cst_13 : f32
    %53 = arith.mulf %47, %47 : vector<16x128xf32>
    %54 = vector.shape_cast %53 : vector<16x128xf32> to vector<1x16x128xf32>
    %cst_14 = arith.constant dense<0.000000e+00> : vector<1xf32>
    %55 = vector.multi_reduction <add>, %54, %cst_14 [1, 2] : vector<1x16x128xf32> to vector<1xf32>
    %56 = vector.shape_cast %55 : vector<1xf32> to vector<1x1x1xf32>
    %57 = vector.extract %56[0, 0, 0] : f32 from vector<1x1x1xf32>
    %cst_15 = arith.constant 4.8828125E-4 : f32
    %58 = arith.mulf %57, %cst_15 : f32
    %59 = arith.mulf %52, %52 : f32
    %60 = arith.subf %58, %59 : f32
    %cst_16 = arith.constant 0.000000e+00 : f32
    %61 = arith.maximumf %60, %cst_16 : f32
    %cst_17 = arith.constant 9.99999993E-9 : f32
    %62 = arith.addf %61, %cst_17 : f32
    %63 = math.rsqrt %62 : f32
    %64 = vector.broadcast %52 : f32 to vector<16x128xf32>
    %65 = arith.subf %47, %64 : vector<16x128xf32>
    %c0_18 = arith.constant 0 : index
    %c0_19 = arith.constant 0 : index
    %66 = vector.load %arg4[%c0_18, %c0_19] : memref<16x1xf32, #tpu.memory_space<vmem>>, vector<16x1xf32>
    %67 = vector.broadcast %63 : f32 to vector<16x1xf32>
    %68 = arith.mulf %66, %67 : vector<16x1xf32>
    %69 = vector.broadcast %68 : vector<16x1xf32> to vector<16x128xf32>
    %70 = arith.mulf %65, %69 : vector<16x128xf32>
    %c0_20 = arith.constant 0 : index
    %c0_21 = arith.constant 0 : index
    %71 = vector.load %arg5[%c0_20, %c0_21] : memref<16x1xf32, #tpu.memory_space<vmem>>, vector<16x1xf32>
    %72 = vector.broadcast %71 : vector<16x1xf32> to vector<16x128xf32>
    %73 = arith.addf %70, %72 : vector<16x128xf32>
    %c0_22 = arith.constant 0 : index
    %c0_23 = arith.constant 0 : index
    %74 = vector.load %arg6[%c0_22, %c0_23] : memref<32x16xbf16, #tpu.memory_space<vmem>>, vector<32x16xbf16>
    %75 = arith.truncf %73 : vector<16x128xf32> to vector<16x128xbf16>
    %cst_24 = arith.constant dense<0.000000e+00> : vector<32x128xf32>
    %76 = tpu.matmul %74, %75, %cst_24 {dimension_numbers = #tpu.dot_dimension_numbers<[1], [0], [0], [1], [0, 0, 1, 1], [], []>} : vector<32x16xbf16>, vector<16x128xbf16>, vector<32x128xf32> -> vector<32x128xf32>
    %c0_25 = arith.constant 0 : index
    %c0_26 = arith.constant 0 : index
    %c0_27 = arith.constant 0 : index
    %77 = vector.load %arg7[%c0_25, %c0_26, %c0_27] : memref<1x32x128xf32, #tpu.memory_space<vmem>>, vector<1x32x128xf32>
    %78 = vector.shape_cast %77 : vector<1x32x128xf32> to vector<32x128xf32>
    %79 = vector.shape_cast %76 : vector<32x128xf32> to vector<1x32x128xf32>
    tpu.vector_store %arg7[%c0_25, %c0_26, %c0_27], %79 {strides = array<i32>} : memref<1x32x128xf32, #tpu.memory_space<vmem>>, vector<1x32x128xf32>,
    return
  }
  func.func @transform_0(%arg0: i32) -> i32 {
    %c0_i32 = arith.constant 0 : i32
    %c0_i32_0 = arith.constant 0 : i32
    return %c0_i32 : i32
  }
  func.func @transform_1(%arg0: i32) -> (i32, i32, i32) {
    %c0_i32 = arith.constant 0 : i32
    %c0_i32_0 = arith.constant 0 : i32
    %c0_i32_1 = arith.constant 0 : i32
    return %arg0, %c0_i32, %c0_i32_0 : i32, i32, i32
  }
  func.func @transform_2(%arg0: i32) -> (i32, i32) {
    %c0_i32 = arith.constant 0 : i32
    %c0_i32_0 = arith.constant 0 : i32
    %c0_i32_1 = arith.constant 0 : i32
    return %c0_i32, %c0_i32_0 : i32, i32
  }
  func.func @transform_3(%arg0: i32) -> (i32, i32) {
    %c0_i32 = arith.constant 0 : i32
    %c0_i32_0 = arith.constant 0 : i32
    %c0_i32_1 = arith.constant 0 : i32
    return %c0_i32, %c0_i32_0 : i32, i32
  }
  func.func @transform_4(%arg0: i32) -> (i32, i32) {
    %c0_i32 = arith.constant 0 : i32
    %c0_i32_0 = arith.constant 0 : i32
    %c0_i32_1 = arith.constant 0 : i32
    return %c0_i32, %c0_i32_0 : i32, i32
  }
  func.func @transform_5(%arg0: i32) -> (i32, i32) {
    %c0_i32 = arith.constant 0 : i32
    %c0_i32_0 = arith.constant 0 : i32
    %c0_i32_1 = arith.constant 0 : i32
    return %c0_i32, %c0_i32_0 : i32, i32
  }
  func.func @transform_6(%arg0: i32) -> (i32, i32, i32) {
    %c0_i32 = arith.constant 0 : i32
    %c0_i32_0 = arith.constant 0 : i32
    %c0_i32_1 = arith.constant 0 : i32
    return %arg0, %c0_i32, %c0_i32_0 : i32, i32, i32
  }
}

</mosaic_0001>

<llo_original>
// kernel: tpu_custom_call.1
$region0: #{tpu_custom_call.1}
  #allocation0 [shape = 'u32[]', space=smem, size = 0x4, offset = 0x4, fixed_abs, tag = 'smem constant byte address 0x4 - core index']
  #allocation1 [shape = 'u32[144,128]{1,0:T(1,128)}', space=vmem, size = 0x12000, scoped, tag = 'internal scratch']
  #allocation2 [shape = 'f32[1]{0:T(128)S(6)}', space=smem, size = 0x200, scoped, tag = 'scoped memory for tpu_custom_call.1']
  %s0 = inlined_call_operand.<no memory space> [shape: f32[1], index: 0, kind: input, shape index: {}]
  %s1 = inlined_call_operand.vmem [shape: f32[2,16,128], index: 1, kind: input, shape index: {}]
  %s2 = inlined_call_operand.vmem [shape: f32[16,3], index: 2, kind: input, shape index: {}]
  %s3 = inlined_call_operand.vmem [shape: f32[16,1], index: 3, kind: input, shape index: {}]
  %s4 = inlined_call_operand.vmem [shape: f32[16,1], index: 4, kind: input, shape index: {}]
  %s5 = inlined_call_operand.vmem [shape: bf16[32,16], index: 5, kind: input, shape index: {}]
  %s6 = inlined_call_operand.hbm [shape: f32[2,32,128], index: 6, kind: output, shape index: {}]
  %s7 = sld [smem:[#allocation0]]
  $region57: #{tpu_custom_call.1} parent=0
    _
  %s9 = ssub.s32 1, %s7
  %s10 = scalar_select 0, %s9, %s7
  %11 = sst [smem:[#allocation2]] %s0
  $region1: #{tpu_custom_call.1} parent=0
    #allocation3 [shape = 'u8[32768]{0}', space=vmem, size = 0x8000, scoped, tag = 'output window, operand 0']
    #allocation4 [shape = 's32[2]{0}', space=sflag, size = 0x8, scoped, tag = 'scoped memory for tpu_custom_call.1']
    %12 = vsyncpa [#allocation4], 0
    %s13 = scalar_lea.sflag [#allocation4], 1
    %14 = vsyncpa %s13, 0
    loop: start=0, step=1, limit=4
    $region2: #{tpu_custom_call.1} parent=1 // loop_pre_header
      _
    $region3: #{tpu_custom_call.1} parent=1 // loop_header
      %s16 = sphi 0, %s20
      %p17 = scmp.ge.s32.totalorder %s16, 4
      %s24 = sphi 0, %s24
      %s26 = sphi 0, %s24
      %s27 = sphi 0, %s26
      %s41 = sphi 0, %s27
      %s47 = sphi 0, %s49
      %s50 = sphi 0, %s47
      %s51 = sphi 0, %s50
      %s67 = sphi 0, %s51
      %s71 = sphi 0, %s71
      %s73 = sphi 0, %s71
      %s74 = sphi 0, %s73
      %s88 = sphi 0, %s74
      %s92 = sphi 0, %s92
      %s94 = sphi 0, %s92
      %s95 = sphi 0, %s94
      %s109 = sphi 0, %s95
      %s113 = sphi 0, %s113
      %s115 = sphi 0, %s113
      %s116 = sphi 0, %s115
      %s130 = sphi 0, %s116
      %s134 = sphi 0, %s134
      %s136 = sphi 0, %s134
      %s137 = sphi 0, %s136
      %s151 = sphi 0, %s137
      %s157 = sphi 0, %s159
      %s160 = sphi 0, %s157
      %s161 = sphi 0, %s160
      %s177 = sphi 0, %s161
    $region4: #{tpu_custom_call.1} parent=1 // loop_header_branch
      %19 = sbr.rel (%p17) target = $region8
    $region5: #{tpu_custom_call.1} parent=1 // loop_body
      %s21 = ssub.s32 %s16, 1
      %s22 = ssub.s32 %s16, 2
      %s23 = sadd.s32 %s16, 1
      %s25 = sadd.s32 %s24, 1
      %p28 = scmp.eq.s32.totalorder %s16, 1
      %p29 = scmp.ne.s32.totalorder %s24, %s26
      %p30 = scmp.eq.s32.totalorder %s16, 0
      %p31 = por %p29, %p30
      %p32 = scmp.ne.s32.totalorder %s24, %s26
      %p33 = scmp.eq.s32.totalorder %s21, 1
      %p34 = por %p32, %p33
      %p35 = scmp.ne.s32.totalorder %s26, %s27
      %p36 = scmp.eq.s32.totalorder %s21, 0
      %p37 = por %p35, %p36
      %p38 = scmp.ne.s32.totalorder %s26, %s27
      %p39 = scmp.eq.s32.totalorder %s22, 1
      %p40 = por %p38, %p39
      %p42 = scmp.ne.s32.totalorder %s27, %s41
      %p43 = scmp.eq.s32.totalorder %s22, 0
      %p44 = por %p42, %p43
      %s45 = ssub.s32 %s16, %s23
      %p46 = scmp.eq.s32.totalorder %s45, 0
      %s48 = sadd.s32 %s47, 1
      %s49 = scalar_select %p46, %s47, %s48
      %p52 = pneg %p46
      %p53 = scmp.eq.s32.totalorder %s16, 1
      %p54 = por %p52, %p53
      %p55 = scmp.ne.s32.totalorder %s47, %s50
      %p56 = scmp.eq.s32.totalorder %s16, 0
      %p57 = por %p55, %p56
      %p58 = scmp.ne.s32.totalorder %s47, %s50
      %p59 = scmp.eq.s32.totalorder %s21, 1
      %p60 = por %p58, %p59
      %p61 = scmp.ne.s32.totalorder %s50, %s51
      %p62 = scmp.eq.s32.totalorder %s21, 0
      %p63 = por %p61, %p62
      %p64 = scmp.ne.s32.totalorder %s50, %s51
      %p65 = scmp.eq.s32.totalorder %s22, 1
      %p66 = por %p64, %p65
      %p68 = scmp.ne.s32.totalorder %s51, %s67
      %p69 = scmp.eq.s32.totalorder %s22, 0
      %p70 = por %p68, %p69
      %s72 = sadd.s32 %s71, 1
      %p75 = scmp.eq.s32.totalorder %s16, 1
      %p76 = scmp.ne.s32.totalorder %s71, %s73
      %p77 = scmp.eq.s32.totalorder %s16, 0
      %p78 = por %p76, %p77
      %p79 = scmp.ne.s32.totalorder %s71, %s73
      %p80 = scmp.eq.s32.totalorder %s21, 1
      %p81 = por %p79, %p80
      %p82 = scmp.ne.s32.totalorder %s73, %s74
      %p83 = scmp.eq.s32.totalorder %s21, 0
      %p84 = por %p82, %p83
      %p85 = scmp.ne.s32.totalorder %s73, %s74
      %p86 = scmp.eq.s32.totalorder %s22, 1
      %p87 = por %p85, %p86
      %p89 = scmp.ne.s32.totalorder %s74, %s88
      %p90 = scmp.eq.s32.totalorder %s22, 0
      %p91 = por %p89, %p90
      %s93 = sadd.s32 %s92, 1
      %p96 = scmp.eq.s32.totalorder %s16, 1
      %p97 = scmp.ne.s32.totalorder %s92, %s94
      %p98 = scmp.eq.s32.totalorder %s16, 0
      %p99 = por %p97, %p98
      %p100 = scmp.ne.s32.totalorder %s92, %s94
      %p101 = scmp.eq.s32.totalorder %s21, 1
      %p102 = por %p100, %p101
      %p103 = scmp.ne.s32.totalorder %s94, %s95
      %p104 = scmp.eq.s32.totalorder %s21, 0
      %p105 = por %p103, %p104
      %p106 = scmp.ne.s32.totalorder %s94, %s95
      %p107 = scmp.eq.s32.totalorder %s22, 1
      %p108 = por %p106, %p107
      %p110 = scmp.ne.s32.totalorder %s95, %s109
      %p111 = scmp.eq.s32.totalorder %s22, 0
      %p112 = por %p110, %p111
      %s114 = sadd.s32 %s113, 1
      %p117 = scmp.eq.s32.totalorder %s16, 1
      %p118 = scmp.ne.s32.totalorder %s113, %s115
      %p119 = scmp.eq.s32.totalorder %s16, 0
      %p120 = por %p118, %p119
      %p121 = scmp.ne.s32.totalorder %s113, %s115
      %p122 = scmp.eq.s32.totalorder %s21, 1
      %p123 = por %p121, %p122
      %p124 = scmp.ne.s32.totalorder %s115, %s116
      %p125 = scmp.eq.s32.totalorder %s21, 0
      %p126 = por %p124, %p125
      %p127 = scmp.ne.s32.totalorder %s115, %s116
      %p128 = scmp.eq.s32.totalorder %s22, 1
      %p129 = por %p127, %p128
      %p131 = scmp.ne.s32.totalorder %s116, %s130
      %p132 = scmp.eq.s32.totalorder %s22, 0
      %p133 = por %p131, %p132
      %s135 = sadd.s32 %s134, 1
      %p138 = scmp.eq.s32.totalorder %s16, 1
      %p139 = scmp.ne.s32.totalorder %s134, %s136
      %p140 = scmp.eq.s32.totalorder %s16, 0
      %p141 = por %p139, %p140
      %p142 = scmp.ne.s32.totalorder %s134, %s136
      %p143 = scmp.eq.s32.totalorder %s21, 1
      %p144 = por %p142, %p143
      %p145 = scmp.ne.s32.totalorder %s136, %s137
      %p146 = scmp.eq.s32.totalorder %s21, 0
      %p147 = por %p145, %p146
      %p148 = scmp.ne.s32.totalorder %s136, %s137
      %p149 = scmp.eq.s32.totalorder %s22, 1
      %p150 = por %p148, %p149
      %p152 = scmp.ne.s32.totalorder %s137, %s151
      %p153 = scmp.eq.s32.totalorder %s22, 0
      %p154 = por %p152, %p153
      %s155 = ssub.s32 %s16, %s23
      %p156 = scmp.eq.s32.totalorder %s155, 0
      %s158 = sadd.s32 %s157, 1
      %s159 = scalar_select %p156, %s157, %s158
      %p162 = pneg %p156
      %p163 = scmp.eq.s32.totalorder %s16, 1
      %p164 = por %p162, %p163
      %p165 = scmp.ne.s32.totalorder %s157, %s160
      %p166 = scmp.eq.s32.totalorder %s16, 0
      %p167 = por %p165, %p166
      %p168 = scmp.ne.s32.totalorder %s157, %s160
      %p169 = scmp.eq.s32.totalorder %s21, 1
      %p170 = por %p168, %p169
      %p171 = scmp.ne.s32.totalorder %s160, %s161
      %p172 = scmp.eq.s32.totalorder %s21, 0
      %p173 = por %p171, %p172
      %p174 = scmp.ne.s32.totalorder %s160, %s161
      %p175 = scmp.eq.s32.totalorder %s22, 1
      %p176 = por %p174, %p175
      %p178 = scmp.ne.s32.totalorder %s161, %s177
      %p179 = scmp.eq.s32.totalorder %s22, 0
      %p180 = por %p178, %p179
      %p181 = scmp.le.s32.totalorder 1, %s16
      %p182 = scmp.lt.s32.totalorder %s16, 3
      %p183 = pnand %p181, %p182
      %p184 = pneg %p183
      // Predicated region
      $region9: #{tpu_custom_call.1} parent=5 // pred_check
        _
      $region10: #{tpu_custom_call.1} parent=5 // pred_check_branch
        %186 = sbr.rel (%p183) target = $region12
      $region11: #{tpu_custom_call.1} parent=5 // pred_region
        %s187 = ssub.s32 %s16, 1
        // Predicated region
        $region13: #{tpu_custom_call.1} parent=11 // pred_check
          %p188 = pneg %p37
        $region14: #{tpu_custom_call.1} parent=11 // pred_check_branch
          %190 = sbr.rel (%p188) target = $region16
        $region15: #{tpu_custom_call.1} parent=11 // pred_region
          _
        $region16: #{tpu_custom_call.1} parent=11 // pred_fallthru
          _
        // Predicated region
        $region17: #{tpu_custom_call.1} parent=11 // pred_check
          %p191 = pneg %p84
        $region18: #{tpu_custom_call.1} parent=11 // pred_check_branch
          %193 = sbr.rel (%p191) target = $region20
        $region19: #{tpu_custom_call.1} parent=11 // pred_region
          _
        $region20: #{tpu_custom_call.1} parent=11 // pred_fallthru
          _
        // Predicated region
        $region21: #{tpu_custom_call.1} parent=11 // pred_check
          %p194 = pneg %p105
        $region22: #{tpu_custom_call.1} parent=11 // pred_check_branch
          %196 = sbr.rel (%p194) target = $region24
        $region23: #{tpu_custom_call.1} parent=11 // pred_region
          _
        $region24: #{tpu_custom_call.1} parent=11 // pred_fallthru
          _
        // Predicated region
        $region25: #{tpu_custom_call.1} parent=11 // pred_check
          %p197 = pneg %p126
        $region26: #{tpu_custom_call.1} parent=11 // pred_check_branch
          %199 = sbr.rel (%p197) target = $region28
        $region27: #{tpu_custom_call.1} parent=11 // pred_region
          _
        $region28: #{tpu_custom_call.1} parent=11 // pred_fallthru
          _
        // Predicated region
        $region29: #{tpu_custom_call.1} parent=11 // pred_check
          %p200 = pneg %p147
        $region30: #{tpu_custom_call.1} parent=11 // pred_check_branch
          %202 = sbr.rel (%p200) target = $region32
        $region31: #{tpu_custom_call.1} parent=11 // pred_region
          _
        $region32: #{tpu_custom_call.1} parent=11 // pred_fallthru
          _
      $region12: #{tpu_custom_call.1} parent=5 // pred_fallthru
        _
      %p203 = scmp.lt.s32.totalorder %s16, 2
      // Predicated region
      $region33: #{tpu_custom_call.1} parent=5 // pred_check
        %p204 = pneg %p203
      $region34: #{tpu_custom_call.1} parent=5 // pred_check_branch
        %206 = sbr.rel (%p204) target = $region36
      $region35: #{tpu_custom_call.1} parent=5 // pred_region
        // Predicated region
        $region37: #{tpu_custom_call.1} parent=35 // pred_check
          %p207 = pneg %p57
        $region38: #{tpu_custom_call.1} parent=35 // pred_check_branch
          %209 = sbr.rel (%p207) target = $region40
        $region39: #{tpu_custom_call.1} parent=35 // pred_region
          %p210 = scmp.lt.s32.totalorder %s16, 1
          %s211 = scalar_select %p210, %s16, 1
          %s212 = smul.addr %s211, 2
          %s213 = smul.addr %s212, 8
          %s214 = scalar_lea.vmem %s1, %s213
        $region40: #{tpu_custom_call.1} parent=35 // pred_fallthru
          _
      $region36: #{tpu_custom_call.1} parent=5 // pred_fallthru
        _
      %p215 = scmp.le.s32.totalorder 1, %s16
      %p216 = scmp.lt.s32.totalorder %s16, 3
      %p217 = pnand %p215, %p216
      %p218 = pneg %p217
      // Predicated region
      $region41: #{tpu_custom_call.1} parent=5 // pred_check
        _
      $region42: #{tpu_custom_call.1} parent=5 // pred_check_branch
        %220 = sbr.rel (%p217) target = $region44
      $region43: #{tpu_custom_call.1} parent=5 // pred_region
        %s221 = ssub.s32 %s16, 1
        %p222 = pneg %p37
        %p223 = pneg %p34
        %p224 = scmp.lt.s32.totalorder %s21, 1
        %s225 = scalar_select %p224, %s21, 1
        %s226 = smul.addr %s225, 2
        %s227 = smul.addr %s226, 8
        %s228 = scalar_lea.vmem %s1, %s227
        %p229 = pneg %p63
        %p230 = pneg %p60
        %p231 = pneg %p84
        %p232 = pneg %p81
        %p233 = pneg %p105
        %p234 = pneg %p102
        %p235 = pneg %p126
        %p236 = pneg %p123
        %p237 = pneg %p147
        %p238 = pneg %p144
        %p239 = pneg %p173
        %p240 = pneg %p170
        %s241 = sand.u32 %s160, 1
        %s242 = scalar_lea.sflag [#allocation4], %s241
        %s243 = sand.u32 %s160, 1
        %s244 = smul.addr %s243, 32
        %s245 = scalar_lea.vmem [#allocation3], %s244
        %p246 = scmp.lt.s32.totalorder %s21, 1
        %s247 = scalar_select %p246, %s21, 1
        %s248 = smul.addr %s247, 2
        %s249 = smul.addr %s248, 8
        %s250 = scalar_lea.vmem %s1, %s249
        %v252 = vld [vmem:[%s250] sm:$0xff]
        %v253 = vld [vmem:[%s250 + $0x8] sm:$0xff]
        %v254 = vlaneseq
        %v255 = vand.u32 %v254, 127
        %v256 = vld [vmem:[%s2] sm:$0xff]
        %v257 = vld [vmem:[%s2 + $0x8] sm:$0xff]
        %259 = vset.pattern.permute.xlu0 1
        %260 = vperm.xlu0 %259, %v256
        %v261 = vpop.permute.xlu0 %260
        %264 = vset.pattern.permute.xlu0 1
        %265 = vperm.xlu0 %264, %v257
        %v266 = vpop.permute.xlu0 %265
        %v268 = vmul.f32 %v252, %v261
        %v269 = vmul.f32 %v253, %v266
        %270 = vrot.lane.b32.xlu0 %v252, 1
        %v271 = vpop.permute.xlu0 %270
        %272 = vrot.lane.b32.xlu0 %v253, 1
        %v273 = vpop.permute.xlu0 %272
        %v274 = vadd.s32 %v255, 4294967295
        %vm275 = vcmp.ge.s32.totalorder %v274, 0
        %vm276 = vcmp.lt.s32.totalorder %v274, 128
        %vm277 = vmand %vm275, %vm276
        %v278 = vsel %vm277, 1, 0
        %v279 = vcvt.s32.f32 %v278
        %v280 = vmul.f32 %v271, %v279
        %v281 = vmul.f32 %v273, %v279
        %282 = vset.pattern.permute.xlu0 0
        %283 = vperm.xlu0 %282, %v256
        %v284 = vpop.permute.xlu0 %283
        %286 = vset.pattern.permute.xlu0 0
        %287 = vperm.xlu0 %286, %v257
        %v288 = vpop.permute.xlu0 %287
        %v290 = vmul.f32 %v280, %v284
        %v291 = vmul.f32 %v281, %v288
        %v292 = vadd.f32 %v268, %v290
        %v293 = vadd.f32 %v269, %v291
        %294 = vrot.lane.b32.xlu0 %v252, 127
        %v295 = vpop.permute.xlu0 %294
        %296 = vrot.lane.b32.xlu0 %v253, 127
        %v297 = vpop.permute.xlu0 %296
        %v298 = vadd.s32 %v255, 1
        %vm299 = vcmp.ge.s32.totalorder %v298, 0
        %vm300 = vcmp.lt.s32.totalorder %v298, 128
        %vm301 = vmand %vm299, %vm300
        %v302 = vsel %vm301, 1, 0
        %v303 = vcvt.s32.f32 %v302
        %v304 = vmul.f32 %v295, %v303
        %v305 = vmul.f32 %v297, %v303
        %306 = vset.pattern.permute.xlu0 2
        %307 = vperm.xlu0 %306, %v256
        %v308 = vpop.permute.xlu0 %307
        %310 = vset.pattern.permute.xlu0 2
        %311 = vperm.xlu0 %310, %v257
        %v312 = vpop.permute.xlu0 %311
        %v314 = vmul.f32 %v304, %v308
        %v315 = vmul.f32 %v305, %v312
        %v316 = vadd.f32 %v292, %v314
        %v317 = vadd.f32 %v293, %v315
        %s318 = sld [smem:[#allocation2]]
        %vm319 = vcmp.ge.f32.partialorder %v316, 0.0
        %vm320 = vcmp.ge.f32.partialorder %v317, 0.0
        %v321 = vstv %s318
        %v322 = vmul.f32 %v321, %v316
        %v323 = vmul.f32 %v321, %v317
        %v324 = vsel %vm319, %v316, %v322
        %v325 = vsel %vm320, %v317, %v323
        %v326 = vadd.f32 %v324, %v325
        %327 = vadd.xlane.f32.xlu0 %v326
        %v328 = vpop.xlane.xlu0 %327
        %v329 = vrot.slane %v328, 4
        %v330 = vadd.f32 %v328, %v329
        %v331 = vrot.slane %v330, 2
        %v332 = vadd.f32 %v330, %v331
        %v333 = vrot.slane %v332, 1
        %v334 = vadd.f32 %v332, %v333
        %s335 = vtos %v334
        %s336 = smul.f32 %s335, 0.00048828125
        %v337 = vmul.f32 %v324, %v324
        %v338 = vmul.f32 %v325, %v325
        %v339 = vadd.f32 %v337, %v338
        %340 = vadd.xlane.f32.xlu0 %v339
        %v341 = vpop.xlane.xlu0 %340
        %v342 = vrot.slane %v341, 4
        %v343 = vadd.f32 %v341, %v342
        %v344 = vrot.slane %v343, 2
        %v345 = vadd.f32 %v343, %v344
        %v346 = vrot.slane %v345, 1
        %v347 = vadd.f32 %v345, %v346
        %s348 = vtos %v347
        %s349 = smul.f32 %s348, 0.00048828125
        %s350 = smul.f32 %s336, %s336
        %s351 = ssub.f32 %s349, %s350
        %s352 = smax.f32 %s351, 0.0
        %s353 = sadd.f32 %s352, 1e-08
        %v354 = vstv %s353
        %v355 = vrsqrt.pop %v354
        %s356 = vtos %v355
        %v357 = vstv %s336
        %v358 = vsub.f32 %v324, %v357
        %v359 = vsub.f32 %v325, %v357
        %v360 = vld [vmem:[%s3] sm:$0xff]
        %v361 = vld [vmem:[%s3 + $0x8] sm:$0xff]
        %v362 = vstv %s356
        %v363 = vmul.f32 %v360, %v362
        %v364 = vmul.f32 %v361, %v362
        %366 = vset.pattern.permute.xlu0 0
        %367 = vperm.xlu0 %366, %v363
        %v368 = vpop.permute.xlu0 %367
        %371 = vset.pattern.permute.xlu0 0
        %372 = vperm.xlu0 %371, %v364
        %v373 = vpop.permute.xlu0 %372
        %v375 = vmul.f32 %v358, %v368
        %v376 = vmul.f32 %v359, %v373
        %v377 = vld [vmem:[%s4] sm:$0xff]
        %v378 = vld [vmem:[%s4 + $0x8] sm:$0xff]
        %380 = vset.pattern.permute.xlu0 0
        %381 = vperm.xlu0 %380, %v377
        %v382 = vpop.permute.xlu0 %381
        %385 = vset.pattern.permute.xlu0 0
        %386 = vperm.xlu0 %385, %v378
        %v387 = vpop.permute.xlu0 %386
        %v389 = vadd.f32 %v375, %v382
        %v390 = vadd.f32 %v376, %v387
        %v391 = vld [vmem:[%s5] sm:$0xf]
        %v392 = vld [vmem:[%s5 + $0x4] sm:$0xf]
        %v393 = vld [vmem:[%s5 + $0x8] sm:$0xf]
        %v394 = vld [vmem:[%s5 + $0xc] sm:$0xf]
        %v395 = vpack.c.bf16 %v390, %v389
        %v400 = vunpack.c.l.b16 %v391
        %v401 = vunpack.c.l.b16 %v392
        %v402 = vunpack.c.l.b16 %v393
        %v403 = vunpack.c.l.b16 %v394
        %v404 = vpack.c.b16 %v401, %v400
        %v405 = vpack.c.b16 %v403, %v402
        %vm406 = vcmask 130048
        %v408 = vsel %vm406, %v404, 0
        %v411 = vsel %vm406, %v405, 0
        %413 = vmatprep.subr.bf16.mxu0 0
        %414 = vmatpush1.bf16.msra.mxu0 0
        %415 = vmatprep.subr.bf16.mxu0 0
        %416 = vmatpush1.bf16.msra.mxu0 0
        %417 = vmatprep.subr.bf16.mxu0 0
        %418 = vmatpush1.bf16.msra.mxu0 0
        %419 = vmatprep.subr.bf16.mxu0 0
        %420 = vmatpush1.bf16.msra.mxu0 0
        %421 = vmatprep.subr.bf16.mxu0 0
        %422 = vmatpush1.bf16.msra.mxu0 0
        %423 = vmatprep.subr.bf16.mxu0 0
        %424 = vmatpush1.bf16.msra.mxu0 0
        %425 = vmatprep.subr.bf16.mxu0 0
        %426 = vmatpush1.bf16.msra.mxu0 0
        %427 = vmatprep.subr.bf16.mxu0 0
        %428 = vmatpush1.bf16.msra.mxu0 %v395
        %429 = vmatprep.subr.bf16.mxu0 0
        %430 = vmatpush2.bf16.msra.mxu0 0
        %431 = vmatprep.subr.bf16.mxu0 0
        %432 = vmatpush2.bf16.msra.mxu0 0
        %433 = vmatprep.subr.bf16.mxu0 0
        %434 = vmatpush2.bf16.msra.mxu0 0
        %435 = vmatprep.subr.bf16.mxu0 0
        %436 = vmatpush2.bf16.msra.mxu0 0
        %437 = vmatprep.subr.bf16.mxu0 0
        %438 = vmatpush2.bf16.msra.mxu0 0
        %439 = vmatprep.subr.bf16.mxu0 0
        %440 = vmatpush2.bf16.msra.mxu0 0
        %441 = vmatprep.subr.bf16.mxu0 0
        %442 = vmatpush2.bf16.msra.mxu0 0
        %443 = vmatprep.subr.bf16.mxu0 0
        %444 = vmatpush2.bf16.msra.mxu0 0
        %445 = vmatprep.mubr.bf16.mxu0 0
        %446 = vmatmul.mubr.bf16.gmra.mxu0 %v408
        %v447 = vpop.f32.mrf.mxu0
        %v448 = vadd.f32 0.0, %v447
        %v449 = vpop.f32.mrf.mxu0
        %v450 = vpop.f32.mrf.mxu0
        %v451 = vadd.f32 0.0, %v450
        %v452 = vpop.f32.mrf.mxu0
        %453 = vmatprep.mubr.bf16.mxu0 0
        %454 = vmatmul.mubr.bf16.gmra.mxu0 %v411
        %v455 = vpop.f32.mrf.mxu0
        %v456 = vadd.f32 0.0, %v455
        %v457 = vpop.f32.mrf.mxu0
        %v458 = vpop.f32.mrf.mxu0
        %v459 = vadd.f32 0.0, %v458
        %v460 = vpop.f32.mrf.mxu0
        %461 = vdwg.mxu0
        %462 = vst [vmem:[%s245] sm:$0xff] %v448
        %463 = vst [vmem:[%s245 + $0x8] sm:$0xff] %v451
        %464 = vst [vmem:[%s245 + $0x10] sm:$0xff] %v456
        %465 = vst [vmem:[%s245 + $0x18] sm:$0xff] %v459
        %s466 = sand.u32 %s160, 1
        %s467 = scalar_lea.sflag [#allocation4], %s466
        %s468 = sand.u32 %s160, 1
        %s469 = smul.addr %s468, 32
        %s470 = scalar_lea.vmem [#allocation3], %s469
        // Predicated region
        $region45: #{tpu_custom_call.1} parent=43 // pred_check
          %p471 = pneg %p170
        $region46: #{tpu_custom_call.1} parent=43 // pred_check_branch
          %473 = sbr.rel (%p471) target = $region48
        $region47: #{tpu_custom_call.1} parent=43 // pred_region
          %s475 = ssub.s32 512, 512
          %476 = vsyncadd %s467, %s475
          %s477 = smul.addr %s21, 4
          %s478 = smul.addr %s477, 128
          %s479 = scalar_lea.hbm %s6, %s478
          %s480 = sshll.u32 %s470, 4
          %s481 = int_to_ptr.vmem [resolvable:$true] %s480
          %486 = dma.vmem_to_hbm [thread:$0]  %s481, 512, %s479, %s467, 128, 128, 8
        $region48: #{tpu_custom_call.1} parent=43 // pred_fallthru
          _
      $region44: #{tpu_custom_call.1} parent=5 // pred_fallthru
        _
      %p487 = scmp.le.s32.totalorder 2, %s16
      // Predicated region
      $region49: #{tpu_custom_call.1} parent=5 // pred_check
        %p488 = pneg %p487
      $region50: #{tpu_custom_call.1} parent=5 // pred_check_branch
        %490 = sbr.rel (%p488) target = $region52
      $region51: #{tpu_custom_call.1} parent=5 // pred_region
        %s491 = ssub.s32 %s16, 2
        // Predicated region
        $region53: #{tpu_custom_call.1} parent=51 // pred_check
          %p492 = pneg %p176
        $region54: #{tpu_custom_call.1} parent=51 // pred_check_branch
          %494 = sbr.rel (%p492) target = $region56
        $region55: #{tpu_custom_call.1} parent=51 // pred_region
          %s495 = sand.u32 %s161, 1
          %s496 = scalar_lea.sflag [#allocation4], %s495
          %s497 = sand.u32 %s161, 1
          %s498 = smul.addr %s497, 32
          %s499 = scalar_lea.vmem [#allocation3], %s498
          %500 = dma.done %s496, 512
        $region56: #{tpu_custom_call.1} parent=51 // pred_fallthru
          _
      $region52: #{tpu_custom_call.1} parent=5 // pred_fallthru
        _
    $region6: #{tpu_custom_call.1} parent=1 // loop_footer
      %s20 = sadd.s32 1, %s16
    $region7: #{tpu_custom_call.1} parent=1 // loop_footer_branch
      %15 = sbr.rel target = $region3
    $region8: #{tpu_custom_call.1} parent=1 // loop_exit
      _
    %501 = vsyncpa [#allocation4], 1
    %s502 = scalar_lea.sflag [#allocation4], 1
    %503 = vsyncpa %s502, 1

</llo_original>
